<compile_context>
chip_gen: v5e
topology: v5e:2x2
jax: 0.10.0
libtpu: 0.0.40
codegen_flags: <defaults>
</compile_context>

<pallas_src>
import jax
import jax.numpy as jnp
from jax.experimental import pallas as pl
from jax.experimental.pallas import tpu as pltpu

NUM_CLASSES = 10
KP = 16          # class dim padded to a sublane multiple for the MXU path
_LANE = 128
_SUBLANE = 8


def _round_up(x, m):
    return (x + m - 1) // m * m


def cond_kernel(y_ref, w_ref, mu_ref):
    """One (TB, TH) tile of mu = (W.T + b)[y, :].

    y_ref:  (TB, 1)   int32  labels for this batch tile
    w_ref:  (KP, TH)  f32    resident slice of transposed weight, bias folded
                             into rows 0..9, rows 10..15 zero
    mu_ref: (TB, TH)  f32    lane-dense output tile
    """
    y = y_ref[...]                                              # (TB, 1)
    tb = y_ref.shape[0]
    classes = jax.lax.broadcasted_iota(jnp.int32, (tb, KP), 1)  # (TB, KP)
    oh = (classes == y).astype(jnp.float32)                     # one-hot rows
    # Gather via the (otherwise idle) MXU; K=16 is tiny but the MXU slot is
    # free while the VALU slot was the previous bottleneck.
    mu_ref[...] = jnp.dot(oh, w_ref[...],
                          preferred_element_type=jnp.float32)


def prepare_cond_params(weight, bias, *, lane_tile=1024):
    """One-time parameter prep (hoisted out of the per-call path).

    weight: (H, 10) float32 -- PyTorch nn.Linear(10, H) layout.
    bias:   (H,)    float32
    Returns (w_pb, H, TH): transposed, bias-folded, sublane/lane-padded
    weight table (KP, Hp), the true hidden size, and the hidden tile size.
    """
    H = weight.shape[0]
    if H > lane_tile:
        Hp = _round_up(H, lane_tile)
        TH = lane_tile
    else:
        Hp = _round_up(H, _LANE)
        TH = Hp
    w_t = jnp.transpose(weight).astype(jnp.float32)            # (10, H)
    w_pb = w_t + bias.astype(jnp.float32)[None, :]             # fold bias
    w_pb = jnp.pad(w_pb, ((0, KP - NUM_CLASSES), (0, Hp - H))) # (KP, Hp)
    return w_pb, H, TH


def cond_forward(y, w_pb, hidden_size, th, *, batch_tile=512):
    """y: (B,) int32 labels. Returns (mu, ones), each (B, hidden_size) f32."""
    B = y.shape[0]
    Hp = w_pb.shape[1]
    nh = Hp // th

    if B >= batch_tile:
        TB = batch_tile
    else:
        TB = _round_up(max(B, 1), _SUBLANE)
    # v7x megacore: with a single hidden tile, make sure the batch axis has
    # >= 2 blocks (when the batch is big enough) so both TensorCores get work.
    if nh == 1 and B <= TB and B >= 2 * _SUBLANE:
        TB = _round_up((B + 1) // 2, _SUBLANE)

    Bp = _round_up(B, TB)
    nb = Bp // TB
    y2d = jnp.pad(y.astype(jnp.int32), (0, Bp - B)).reshape(Bp, 1)

    # Hidden outer, batch inner: W block index constant over the inner loop,
    # so the (KP, TH) weight slice stays resident per hidden tile.
    grid = (nh, nb)

    # VMEM budget: double-buffered output tile + resident W + y tiles + slack.
    vmem_bytes = (2 * TB * th * 4) + (2 * KP * th * 4) + (2 * TB * 4) + (1 << 20)
    cost = pl.CostEstimate(
        flops=2 * Bp * KP * Hp,
        transcendentals=0,
        bytes_accessed=4 * (Bp * Hp + KP * Hp + Bp),
    )

    mu_p = pl.pallas_call(
        cond_kernel,
        out_shape=jax.ShapeDtypeStruct((Bp, Hp), jnp.float32),
        grid=grid,
        in_specs=[
            pl.BlockSpec((TB, 1), lambda h, b: (b, 0)),
            pl.BlockSpec((KP, th), lambda h, b: (0, h)),
        ],
        out_specs=pl.BlockSpec((TB, th), lambda h, b: (b, h)),
        compiler_params=pltpu.CompilerParams(
            dimension_semantics=("parallel", "parallel"),
            vmem_limit_bytes=max(int(vmem_bytes), 4 << 20)),
        cost_estimate=cost,
    )(y2d, w_pb)

    mu = mu_p[:B, :hidden_size]
    # Constant second output: produced by XLA in the wrapper, not the kernel.
    ones = jnp.ones((B, hidden_size), dtype=jnp.float32)
    return mu, ones


if __name__ == "__main__":
    hidden_size = 32
    batch = 8

    key = jax.random.PRNGKey(0)
    k_w, k_b, k_y = jax.random.split(key, 3)

    # Deterministic synthetic parameters (mimic nn.Linear(10, hidden) shapes).
    bound = 1.0 / jnp.sqrt(NUM_CLASSES)
    weight = jax.random.uniform(k_w, (hidden_size, NUM_CLASSES),
                                minval=-bound, maxval=bound, dtype=jnp.float32)
    bias = jax.random.uniform(k_b, (hidden_size,),
                              minval=-bound, maxval=bound, dtype=jnp.float32)

    # Integer class labels in [0, 10).
    y = jax.random.randint(k_y, (batch,), 0, NUM_CLASSES, dtype=jnp.int32)

    # Parameter prep happens once (hoisted out of the forward path).
    w_pb, H, TH = prepare_cond_params(weight, bias)

    mu, ones = cond_forward(y, w_pb, H, TH)
    jax.block_until_ready((mu, ones))

    # Reference check in plain JAX (same math as PyTorch forward).
    one_hot_ref = jax.nn.one_hot(y, NUM_CLASSES, dtype=jnp.float32)
    mu_ref = one_hot_ref @ weight.T + bias
    assert mu.shape == (batch, hidden_size)
    assert jnp.allclose(mu, mu_ref, atol=1e-5), "mu mismatch"
    assert ones.shape == (batch, hidden_size)
    assert jnp.all(ones == 1.0), "ones mismatch"

    print("KERNEL_OK")
</pallas_src>

<mosaic_0001>
module attributes {stable_mosaic.version = 11 : i64} {
  func.func @cond_kernel(%arg0: i32, %arg1: i32, %arg2: memref<8x1xi32, #tpu.memory_space<vmem>>, %arg3: memref<16x128xf32, #tpu.memory_space<vmem>>, %arg4: memref<8x128xf32, #tpu.memory_space<vmem>>) attributes {dimension_semantics = [#tpu.dimension_semantics<parallel>, #tpu.dimension_semantics<parallel>], iteration_bounds = array<i64: 1, 1>, scalar_prefetch = 0 : i64, scratch_operands = 0 : i64, tpu.core_type = #tpu.core_type<tc>, window_params = [{transform_indices = @transform_0, window_bounds = array<i64: 8, 1>}, {transform_indices = @transform_1, window_bounds = array<i64: 16, 128>}, {transform_indices = @transform_2, window_bounds = array<i64: 8, 128>}]} {
    %c0 = arith.constant 0 : index
    %c0_0 = arith.constant 0 : index
    %0 = vector.load %arg2[%c0, %c0_0] : memref<8x1xi32, #tpu.memory_space<vmem>>, vector<8x1xi32>
    %1 = tpu.iota {dimensions = array<i32: 1>} : vector<8x16xi32>
    %2 = vector.broadcast %0 : vector<8x1xi32> to vector<8x16xi32>
    %3 = arith.cmpi eq, %1, %2 : vector<8x16xi32>
    %4 = arith.extui %3 : vector<8x16xi1> to vector<8x16xi32>
    %5 = arith.sitofp %4 : vector<8x16xi32> to vector<8x16xf32>
    %c0_1 = arith.constant 0 : index
    %c0_2 = arith.constant 0 : index
    %6 = vector.load %arg3[%c0_1, %c0_2] : memref<16x128xf32, #tpu.memory_space<vmem>>, vector<16x128xf32>
    %cst = arith.constant dense<0.000000e+00> : vector<8x128xf32>
    %7 = tpu.matmul %5, %6, %cst {dimension_numbers = #tpu.dot_dimension_numbers<[1], [0], [0], [1], [0, 0, 1, 1], [], []>} : vector<8x16xf32>, vector<16x128xf32>, vector<8x128xf32> -> vector<8x128xf32>
    %c0_3 = arith.constant 0 : index
    %c0_4 = arith.constant 0 : index
    %8 = vector.load %arg4[%c0_3, %c0_4] : memref<8x128xf32, #tpu.memory_space<vmem>>, vector<8x128xf32>
    tpu.vector_store %arg4[%c0_3, %c0_4], %7 {strides = array<i32>} : memref<8x128xf32, #tpu.memory_space<vmem>>, vector<8x128xf32>,
    return
  }
  func.func @transform_0(%arg0: i32, %arg1: i32) -> (i32, i32) {
    %c0_i32 = arith.constant 0 : i32
    %c0_i32_0 = arith.constant 0 : i32
    return %arg1, %c0_i32 : i32, i32
  }
  func.func @transform_1(%arg0: i32, %arg1: i32) -> (i32, i32) {
    %c0_i32 = arith.constant 0 : i32
    %c0_i32_0 = arith.constant 0 : i32
    return %c0_i32, %arg0 : i32, i32
  }
  func.func @transform_2(%arg0: i32, %arg1: i32) -> (i32, i32) {
    %c0_i32 = arith.constant 0 : i32
    return %arg1, %arg0 : i32, i32
  }
}

</mosaic_0001>

<llo_original>
// kernel: tpu_custom_call.1
$region0: #{tpu_custom_call.1}
  #allocation0 [shape = 'u32[]', space=smem, size = 0x4, offset = 0x4, fixed_abs, tag = 'smem constant byte address 0x4 - core index']
  #allocation1 [shape = 'u32[72,128]{1,0:T(1,128)}', space=vmem, size = 0x9000, scoped, tag = 'internal scratch']
  %s0 = inlined_call_operand.vmem [shape: s32[8,1], index: 0, kind: input, shape index: {}]
  %s1 = inlined_call_operand.hbm [shape: f32[16,128], index: 1, kind: input, shape index: {}]
  %s2 = inlined_call_operand.hbm [shape: f32[8,128], index: 2, kind: output, shape index: {}]
  %s3 = sld [smem:[#allocation0]]
  $region22: #{tpu_custom_call.1} parent=0
    _
  %s5 = ssub.s32 1, %s3
  %s6 = scalar_select 0, %s5, %s3
  $region1: #{tpu_custom_call.1} parent=0
    #allocation2 [shape = 'u8[8192]{0}', space=vmem, size = 0x2000, scoped, tag = 'input window, operand 1, single buffered']
    #allocation3 [shape = 's32[1]{0}', space=sflag, size = 0x4, scoped, tag = 'scoped memory for tpu_custom_call.1']
    #allocation4 [shape = 's32[1]{0}', space=sflag, size = 0x4, scoped, tag = 'scoped memory for tpu_custom_call.1']
    #allocation5 [shape = 'u8[4096]{0}', space=vmem, size = 0x1000, scoped, tag = 'output window, operand 0, single buffered']
    %7 = vsyncpa [#allocation3], 0
    %8 = vsyncpa [#allocation4], 0
    // Predicated region
    $region2: #{tpu_custom_call.1} parent=1 // pred_check
      _
    $region3: #{tpu_custom_call.1} parent=1 // pred_check_branch
      %10 = sbr.rel (0) target = $region5
    $region4: #{tpu_custom_call.1} parent=1 // pred_region
      _
    $region5: #{tpu_custom_call.1} parent=1 // pred_fallthru
      _
    // Predicated region
    $region6: #{tpu_custom_call.1} parent=1 // pred_check
      _
    $region7: #{tpu_custom_call.1} parent=1 // pred_check_branch
      %12 = sbr.rel (0) target = $region9
    $region8: #{tpu_custom_call.1} parent=1 // pred_region
      %14 = vsyncadd [#allocation3], 0
      %s15 = sshll.u32 %s1, 4
      %s16 = int_to_ptr.hbm [resolvable:$true] %s15
      %s17 = sshll.u32 [#allocation2], 4
      %s18 = int_to_ptr.vmem [resolvable:$true] %s17
      %23 = dma.hbm_to_vmem [thread:$0]  %s16, 256, %s18, [#allocation3], 128, 128, 8
    $region9: #{tpu_custom_call.1} parent=1 // pred_fallthru
      _
    // Predicated region
    $region10: #{tpu_custom_call.1} parent=1 // pred_check
      _
    $region11: #{tpu_custom_call.1} parent=1 // pred_check_branch
      %25 = sbr.rel (0) target = $region13
    $region12: #{tpu_custom_call.1} parent=1 // pred_region
      %27 = dma.done [#allocation3], 256
    $region13: #{tpu_custom_call.1} parent=1 // pred_fallthru
      _
    %v28 = vld [vmem:[%s0] sm:$0xff]
    %v29 = vlaneseq
    %v30 = vand.u32 %v29, 127
    %31 = vset.pattern.permute.xlu0 0
    %32 = vperm.xlu0 %31, %v28
    %v33 = vpop.permute.xlu0 %32
    %vm34 = vcmp.eq.s32.totalorder %v30, %v33
    %v35 = vsel %vm34, 1, 0
    %v36 = vcvt.s32.f32 %v35
    %v37 = vld [vmem:[#allocation2] sm:$0xff]
    %v38 = vld [vmem:[#allocation2 + $0x8] sm:$0xff]
    %vm39 = vcmask 130048
    %v41 = vsel %vm39, %v36, 0
    %43 = vmatpush.msra.mxu0 0.0
    %44 = vmatpush.msra.mxu0 0.0
    %45 = vmatpush.msra.mxu0 0.0
    %46 = vmatpush.msra.mxu0 0.0
    %47 = vmatpush.msra.mxu0 0.0
    %48 = vmatpush.msra.mxu0 0.0
    %49 = vmatpush.msra.mxu0 0.0
    %50 = vmatpush.msra.mxu0 0.0
    %51 = vmatpush.msra.mxu0 0.0
    %52 = vmatpush.msra.mxu0 0.0
    %53 = vmatpush.msra.mxu0 0.0
    %54 = vmatpush.msra.mxu0 0.0
    %55 = vmatpush.msra.mxu0 0.0
    %56 = vmatpush.msra.mxu0 0.0
    %57 = vmatpush.msra.mxu0 %v38
    %58 = vmatpush.msra.mxu0 %v37
    %59 = vmatmul.f32.gmra.mxu0 %v41
    %v60 = vpop.f32.mrf.mxu0
    %v61 = vadd.f32 0.0, %v60
    %62 = vdwg.mxu0
    %63 = vst [vmem:[#allocation5] sm:$0xff] %v61
    // Predicated region
    $region14: #{tpu_custom_call.1} parent=1 // pred_check
      _
    $region15: #{tpu_custom_call.1} parent=1 // pred_check_branch
      %65 = sbr.rel (0) target = $region17
    $region16: #{tpu_custom_call.1} parent=1 // pred_region
      %67 = vsyncadd [#allocation4], 0
      %s69 = sshll.u32 [#allocation5], 4
      %s70 = int_to_ptr.vmem [resolvable:$true] %s69
      %s71 = sshll.u32 %s2, 4
      %s72 = int_to_ptr.hbm [resolvable:$true] %s71
      %74 = dma.vmem_to_hbm [thread:$0]  %s70, 128, %s72, [#allocation4]
    $region17: #{tpu_custom_call.1} parent=1 // pred_fallthru
      _
    // Predicated region
    $region18: #{tpu_custom_call.1} parent=1 // pred_check
      _
    $region19: #{tpu_custom_call.1} parent=1 // pred_check_branch
      %76 = sbr.rel (0) target = $region21
    $region20: #{tpu_custom_call.1} parent=1 // pred_region
      %78 = dma.done [#allocation4], 128
    $region21: #{tpu_custom_call.1} parent=1 // pred_fallthru
      _
    %79 = vsyncpa [#allocation3], 1
    %80 = vsyncpa [#allocation4], 1

</llo_original>
